<compile_context>
chip_gen: v6e
topology: v6e:2x2x1
jax: 0.10.0
libtpu: 0.0.40
codegen_flags: <defaults>
</compile_context>

<pallas_src>
import functools

import jax
import jax.numpy as jnp
from jax.experimental import pallas as pl
from jax.experimental.pallas import tpu as pltpu

architecture_config = [
    (7, 64, 2, 3), 'M', (3, 192, 1, 1), 'M', (1, 128, 1, 1), (3, 256, 1, 1),
    (1, 256, 1, 0), (3, 512, 1, 1), 'M', [(1, 256, 1, 0), (3, 512, 1, 1), 4],
    (1, 512, 1, 0), (3, 1024, 1, 1), 'M', [(1, 512, 1, 0), (3, 1024, 1, 1), 2],
    (3, 1024, 1, 1), (3, 1024, 2, 1), (3, 1024, 1, 1), (3, 1024, 1, 1)
]

_VMEM_LIMIT = 32 * 1024 * 1024


def _cdiv(a, b):
  return -(-a // b)


def _round_up(x, m):
  return _cdiv(x, m) * m


# ---------------------------------------------------------------------------
# Tiling selection
# ---------------------------------------------------------------------------
def _pick_k_tiling(K, max_tk_blocks=8):
  """tk (multiple of 128) and padded Kp with minimal zero-padding slack."""
  kb = _cdiv(K, 128)
  best = None
  for nk in range(_cdiv(kb, max_tk_blocks), kb + 1):
    tkb = _cdiv(kb, nk)
    slack = tkb * nk - kb
    cand = (slack, nk, tkb)
    if best is None or cand < best:
      best = cand
    if slack == 0:
      break
  _, nk, tkb = best
  return tkb * 128, tkb * nk * 128           # (tk, Kp)


def _pick_n_tiling(N, max_tn_blocks=4):
  """tn (multiple of 128) keeping >=2 j-blocks when N >= 256 (v7x megacore)."""
  nb = _cdiv(N, 128)
  tnb = min(max_tn_blocks, max(1, nb // 2)) if nb >= 2 else 1
  nj = _cdiv(nb, tnb)
  tnb = _cdiv(nb, nj)
  return tnb * 128, tnb * nj * 128            # (tn, Np)


# ---------------------------------------------------------------------------
# Pallas kernels: tiled bf16 matmul, f32 acc, fused bias + LeakyReLU epilogue
# ---------------------------------------------------------------------------
def _mm_kernel_single(a_ref, b_ref, bias_ref, o_ref, *, apply_act):
  # Single K step: no accumulator scratch, write straight to the output tile.
  y = jnp.dot(a_ref[...], b_ref[...], preferred_element_type=jnp.float32)
  y = y + bias_ref[...]
  if apply_act:                               # LeakyReLU(0.1)
    y = jnp.where(y > 0, y, 0.1 * y)
  o_ref[...] = y.astype(o_ref.dtype)


def _mm_kernel_multi(a_ref, b_ref, bias_ref, o_ref, acc_ref, *, apply_act):
  k = pl.program_id(2)

  @pl.when(k == 0)
  def _():
    acc_ref[...] = jnp.zeros_like(acc_ref)

  acc_ref[...] += jnp.dot(a_ref[...], b_ref[...],
                          preferred_element_type=jnp.float32)

  @pl.when(k == pl.num_programs(2) - 1)
  def _():
    y = acc_ref[...] + bias_ref[...]
    if apply_act:                             # LeakyReLU(0.1)
      y = jnp.where(y > 0, y, 0.1 * y)
    o_ref[...] = y.astype(o_ref.dtype)


def prepare_weight(wmat, bias):
  """Pack a (K, N) weight matrix + per-column bias once, at init time.

  Pads to the chosen (Kp, Np) tiling and casts weights to bf16; bias stays f32.
  """
  K, N = wmat.shape
  tk, Kp = _pick_k_tiling(K)
  tn, Np = _pick_n_tiling(N)
  w_p = jnp.pad(wmat.astype(jnp.float32),
                ((0, Kp - K), (0, Np - N))).astype(jnp.bfloat16)
  b_p = jnp.pad(bias.reshape(1, N).astype(jnp.float32), ((0, 0), (0, Np - N)))
  return {'w': w_p, 'bias': b_p, 'k': K, 'n': N, 'tk': tk, 'tn': tn}


def matmul_bias_act(a, packed, *, apply_act, out_dtype=jnp.bfloat16):
  """act((a @ w) + bias) with a Pallas TPU kernel; w/bias pre-packed."""
  M, K = a.shape
  w_p, bias_p = packed['w'], packed['bias']
  N, tk, tn = packed['n'], packed['tk'], packed['tn']
  Kp, Np = w_p.shape
  assert K == packed['k']

  tm = min(256, _round_up(M, 16))
  Mp = _round_up(M, tm)
  a_p = a.astype(jnp.bfloat16)
  if Mp != M or Kp != K:
    # TODO(synk): pad of the activation matrix is an extra copy; fusing im2col
    # + masked last block into the kernel would remove it entirely.
    a_p = jnp.pad(a_p, ((0, Mp - M), (0, Kp - K)))

  nk = Kp // tk
  if nk == 1:
    grid = (Mp // tm, Np // tn)
    out = pl.pallas_call(
        functools.partial(_mm_kernel_single, apply_act=apply_act),
        out_shape=jax.ShapeDtypeStruct((Mp, Np), out_dtype),
        grid_spec=pltpu.PrefetchScalarGridSpec(
            num_scalar_prefetch=0,
            grid=grid,
            in_specs=[
                pl.BlockSpec((tm, tk), lambda i, j: (i, 0)),
                pl.BlockSpec((tk, tn), lambda i, j: (0, j)),
                pl.BlockSpec((1, tn), lambda i, j: (0, j)),
            ],
            out_specs=pl.BlockSpec((tm, tn), lambda i, j: (i, j)),
        ),
        compiler_params=pltpu.CompilerParams(
            dimension_semantics=("parallel", "parallel"),
            vmem_limit_bytes=_VMEM_LIMIT),
    )(a_p, w_p, bias_p)
  else:
    grid = (Mp // tm, Np // tn, nk)
    out = pl.pallas_call(
        functools.partial(_mm_kernel_multi, apply_act=apply_act),
        out_shape=jax.ShapeDtypeStruct((Mp, Np), out_dtype),
        grid_spec=pltpu.PrefetchScalarGridSpec(
            num_scalar_prefetch=0,
            grid=grid,
            in_specs=[
                pl.BlockSpec((tm, tk), lambda i, j, k: (i, k)),
                pl.BlockSpec((tk, tn), lambda i, j, k: (k, j)),
                pl.BlockSpec((1, tn), lambda i, j, k: (0, j)),
            ],
            out_specs=pl.BlockSpec((tm, tn), lambda i, j, k: (i, j)),
            scratch_shapes=[pltpu.VMEM((tm, tn), jnp.float32)],
        ),
        compiler_params=pltpu.CompilerParams(
            dimension_semantics=("parallel", "parallel", "arbitrary"),
            vmem_limit_bytes=_VMEM_LIMIT),
    )(a_p, w_p, bias_p)

  if Mp != M or Np != N:
    out = out[:M, :N]
  return out


# ---------------------------------------------------------------------------
# Layer wrappers (JAX glue: im2col / reshape; compute happens in the kernel)
# ---------------------------------------------------------------------------
def conv_bn_lrelu(x, layer):
  """CNNBlock on NHWC activations: Conv2d(bias=False)+BN(eval)+LeakyReLU."""
  n, h, w, c = x.shape
  kh_, kw_ = layer['ksize']
  stride, pad = layer['stride'], layer['pad']
  oh = (h + 2 * pad - kh_) // stride + 1
  ow = (w + 2 * pad - kw_) // stride + 1
  xp = x
  if pad:
    xp = jnp.pad(x, ((0, 0), (pad, pad), (pad, pad), (0, 0)))

  if kh_ == 1 and kw_ == 1 and stride == 1:
    patches = xp.reshape(n * oh * ow, c)
  else:
    # TODO(synk): im2col patches are materialized in HBM; a strided-gather
    # BlockSpec inside the kernel would avoid this extra round trip.
    cols = []
    for dh in range(kh_):
      for dw in range(kw_):
        cols.append(jax.lax.slice(
            xp, (0, dh, dw, 0),
            (n, dh + (oh - 1) * stride + 1, dw + (ow - 1) * stride + 1, c),
            (1, stride, stride, 1)))                     # (n, oh, ow, c)
    patches = jnp.stack(cols, axis=3).reshape(n * oh * ow, kh_ * kw_ * c)

  y = matmul_bias_act(patches, layer['packed'], apply_act=True)
  return y.reshape(n, oh, ow, -1)                        # NHWC


def maxpool2x2(x):
  # MaxPool2d(kernel_size=2, stride=2), PyTorch floor mode (drops odd row/col).
  # Cheap lane-dense reduction on NHWC, kept in plain JAX.
  n, h, w, c = x.shape
  hh, ww = (h // 2) * 2, (w // 2) * 2
  x = x[:, :hh, :ww, :]
  return x.reshape(n, h // 2, 2, w // 2, 2, c).max(axis=(2, 4))


# ---------------------------------------------------------------------------
# Deterministic parameter construction (mirrors Yolov1.__init__)
# ---------------------------------------------------------------------------
def init_params(key, in_channels, split_size, num_boxes, num_classes,
                eps=1e-5):
  S, B, C = split_size, num_boxes, num_classes

  conv_defs = []
  c_in = in_channels
  for item in architecture_config:
    if isinstance(item, tuple):
      conv_defs.append((c_in, item[1], item[0], item[2], item[3]))
      c_in = item[1]
    elif isinstance(item, str):
      conv_defs.append('M')
    elif isinstance(item, list):
      c1, c2, reps = item
      for _ in range(reps):
        conv_defs.append((c_in, c1[1], c1[0], c1[2], c1[3]))
        conv_defs.append((c1[1], c2[1], c2[0], c2[2], c2[3]))
        c_in = c2[1]

  n_conv = sum(1 for d in conv_defs if d != 'M')
  keys = jax.random.split(key, n_conv + 4)
  ki = 0

  darknet = []
  for d in conv_defs:
    if d == 'M':
      darknet.append({'type': 'maxpool'})
      continue
    cin, cout, ksz, stride, pad = d
    fan_in = cin * ksz * ksz
    w = jax.random.normal(keys[ki], (cout, cin, ksz, ksz),
                          jnp.float32) * (2.0 / fan_in) ** 0.5
    ki += 1
    # BatchNorm2d (inference mode): gamma=1, beta=0, mean=0, var=1.
    gamma = jnp.ones((cout,), jnp.float32)
    beta = jnp.zeros((cout,), jnp.float32)
    mean = jnp.zeros((cout,), jnp.float32)
    var = jnp.ones((cout,), jnp.float32)
    scale = gamma / jnp.sqrt(var + eps)
    bias = beta - mean * scale
    # (Cout,Cin,KH,KW) -> (KH*KW*Cin, Cout) with the BN scale folded in.
    wmat = w.transpose(2, 3, 1, 0).reshape(ksz * ksz * cin, cout)
    wmat = wmat * scale[None, :]
    darknet.append({'type': 'conv', 'ksize': (ksz, ksz), 'stride': stride,
                    'pad': pad, 'packed': prepare_weight(wmat, bias)})

  fc_in = 1024 * S * S
  hidden = 496
  out_dim = S * S * (C + B * 5)
  w1 = jax.random.normal(keys[ki], (hidden, fc_in), jnp.float32) / fc_in ** 0.5
  ki += 1
  b1 = jax.random.normal(keys[ki], (hidden,), jnp.float32) * 0.01
  ki += 1
  w2 = jax.random.normal(keys[ki], (out_dim, hidden),
                         jnp.float32) / hidden ** 0.5
  ki += 1
  b2 = jax.random.normal(keys[ki], (out_dim,), jnp.float32) * 0.01
  return {'darknet': darknet,
          'fc1': prepare_weight(w1.T, b1),     # pre-transposed once
          'fc2': prepare_weight(w2.T, b2),
          'out_dim': out_dim}


# ---------------------------------------------------------------------------
# Forward pass (== Yolov1.forward)
# ---------------------------------------------------------------------------
def yolov1_forward(params, x):
  # x: NCHW (PyTorch convention) -> NHWC once; bf16 inter-layer activations.
  x = jnp.transpose(x, (0, 2, 3, 1)).astype(jnp.bfloat16)
  for layer in params['darknet']:
    if layer['type'] == 'conv':
      x = conv_bn_lrelu(x, layer)
    else:
      x = maxpool2x2(x)

  # torch.flatten(x, start_dim=1) is defined on NCHW ordering.
  n = x.shape[0]
  x = jnp.transpose(x, (0, 3, 1, 2)).reshape(n, -1)

  # fcs: Flatten -> Linear(1024*S*S, 496) -> Dropout(0.0)=identity
  #      -> LeakyReLU(0.1) -> Linear(496, S*S*(C+B*5))
  x = matmul_bias_act(x, params['fc1'], apply_act=True,
                      out_dtype=jnp.bfloat16)
  x = matmul_bias_act(x, params['fc2'], apply_act=False,
                      out_dtype=jnp.float32)
  return x


if __name__ == "__main__":
  key = jax.random.PRNGKey(0)
  pkey, xkey = jax.random.split(key)

  # Small config: S=1, B=2, C=3. With this architecture_config a 64x64 input
  # reaches a 1x1x1024 feature map, matching Linear(1024*S*S, 496).
  S, B, C = 1, 2, 3
  params = init_params(pkey, in_channels=3, split_size=S,
                       num_boxes=B, num_classes=C)
  x = jax.random.normal(xkey, (2, 3, 64, 64), jnp.float32)

  out = yolov1_forward(params, x)
  out = jax.block_until_ready(out)

  assert out.shape == (2, S * S * (C + B * 5)), out.shape
  assert bool(jnp.all(jnp.isfinite(out)))
  print("KERNEL_OK")
</pallas_src>

<mosaic_0001>
module attributes {stable_mosaic.version = 11 : i64} {
  func.func @_mm_kernel_single(%arg0: i32, %arg1: i32, %arg2: memref<256x256xbf16, #tpu.memory_space<vmem>>, %arg3: memref<256x128xbf16, #tpu.memory_space<vmem>>, %arg4: memref<1x128xf32, #tpu.memory_space<vmem>>, %arg5: memref<256x128xbf16, #tpu.memory_space<vmem>>) attributes {dimension_semantics = [#tpu.dimension_semantics<parallel>, #tpu.dimension_semantics<parallel>], iteration_bounds = array<i64: 8, 1>, scalar_prefetch = 0 : i64, scratch_operands = 0 : i64, tpu.core_type = #tpu.core_type<tc>, window_params = [{transform_indices = @transform_0, window_bounds = array<i64: 256, 256>}, {transform_indices = @transform_1, window_bounds = array<i64: 256, 128>}, {transform_indices = @transform_2, window_bounds = array<i64: 1, 128>}, {transform_indices = @transform_3, window_bounds = array<i64: 256, 128>}]} {
    %c0 = arith.constant 0 : index
    %c0_0 = arith.constant 0 : index
    %0 = vector.load %arg2[%c0, %c0_0] : memref<256x256xbf16, #tpu.memory_space<vmem>>, vector<256x256xbf16>
    %c0_1 = arith.constant 0 : index
    %c0_2 = arith.constant 0 : index
    %1 = vector.load %arg3[%c0_1, %c0_2] : memref<256x128xbf16, #tpu.memory_space<vmem>>, vector<256x128xbf16>
    %cst = arith.constant dense<0.000000e+00> : vector<256x128xf32>
    %2 = tpu.matmul %0, %1, %cst {dimension_numbers = #tpu.dot_dimension_numbers<[1], [0], [0], [1], [0, 0, 1, 1], [], []>} : vector<256x256xbf16>, vector<256x128xbf16>, vector<256x128xf32> -> vector<256x128xf32>
    %c0_3 = arith.constant 0 : index
    %c0_4 = arith.constant 0 : index
    %3 = vector.load %arg4[%c0_3, %c0_4] : memref<1x128xf32, #tpu.memory_space<vmem>>, vector<1x128xf32>
    %4 = vector.broadcast %3 : vector<1x128xf32> to vector<256x128xf32>
    %5 = arith.addf %2, %4 : vector<256x128xf32>
    %cst_5 = arith.constant 0.000000e+00 : f32
    %6 = vector.broadcast %cst_5 : f32 to vector<256x128xf32>
    %7 = arith.cmpf ogt, %5, %6 : vector<256x128xf32>
    %cst_6 = arith.constant 1.000000e-01 : f32
    %8 = vector.broadcast %cst_6 : f32 to vector<256x128xf32>
    %9 = arith.mulf %8, %5 : vector<256x128xf32>
    %10 = arith.select %7, %5, %9 : vector<256x128xi1>, vector<256x128xf32>
    %11 = arith.truncf %10 : vector<256x128xf32> to vector<256x128xbf16>
    %c0_7 = arith.constant 0 : index
    %c0_8 = arith.constant 0 : index
    %12 = vector.load %arg5[%c0_7, %c0_8] : memref<256x128xbf16, #tpu.memory_space<vmem>>, vector<256x128xbf16>
    tpu.vector_store %arg5[%c0_7, %c0_8], %11 {strides = array<i32>} : memref<256x128xbf16, #tpu.memory_space<vmem>>, vector<256x128xbf16>,
    return
  }
  func.func @transform_0(%arg0: i32, %arg1: i32) -> (i32, i32) {
    %c0_i32 = arith.constant 0 : i32
    %c0_i32_0 = arith.constant 0 : i32
    return %arg0, %c0_i32 : i32, i32
  }
  func.func @transform_1(%arg0: i32, %arg1: i32) -> (i32, i32) {
    %c0_i32 = arith.constant 0 : i32
    %c0_i32_0 = arith.constant 0 : i32
    return %c0_i32, %arg1 : i32, i32
  }
  func.func @transform_2(%arg0: i32, %arg1: i32) -> (i32, i32) {
    %c0_i32 = arith.constant 0 : i32
    %c0_i32_0 = arith.constant 0 : i32
    return %c0_i32, %arg1 : i32, i32
  }
  func.func @transform_3(%arg0: i32, %arg1: i32) -> (i32, i32) {
    %c0_i32 = arith.constant 0 : i32
    return %arg0, %arg1 : i32, i32
  }
}

</mosaic_0001>

<llo_original>
// kernel: tpu_custom_call.1
$region0: #{tpu_custom_call.1}
  #allocation0 [shape = 'u32[]', space=smem, size = 0x4, offset = 0x4, fixed_abs, tag = 'smem constant byte address 0x4 - core index']
  #allocation1 [shape = 'u32[144,128]{1,0:T(1,128)}', space=vmem, size = 0x12000, scoped, tag = 'internal scratch']
  %s0 = inlined_call_operand.hbm [shape: bf16[2048,256], index: 0, kind: input, shape index: {}]
  %s1 = inlined_call_operand.hbm [shape: bf16[256,128], index: 1, kind: input, shape index: {}]
  %s2 = inlined_call_operand.vmem [shape: f32[1,128], index: 2, kind: input, shape index: {}]
  %s3 = inlined_call_operand.hbm [shape: bf16[2048,128], index: 3, kind: output, shape index: {}]
  %s4 = sld [smem:[#allocation0]]
  $region53: #{tpu_custom_call.1} parent=0
    _
  %s6 = ssub.s32 1, %s4
  %s7 = scalar_select 0, %s6, %s4
  $region1: #{tpu_custom_call.1} parent=0
    #allocation2 [shape = 'u8[262144]{0}', space=vmem, size = 0x40000, scoped, tag = 'input window, operand 0']
    #allocation3 [shape = 's32[2]{0}', space=sflag, size = 0x8, scoped, tag = 'scoped memory for tpu_custom_call.1']
    #allocation4 [shape = 's32[2]{0}', space=sflag, size = 0x8, scoped, tag = 'scoped memory for tpu_custom_call.1']
    #allocation5 [shape = 'u8[65536]{0}', space=vmem, size = 0x10000, scoped, tag = 'input window, operand 1, single buffered']
    #allocation6 [shape = 's32[1]{0}', space=sflag, size = 0x4, scoped, tag = 'scoped memory for tpu_custom_call.1']
    #allocation7 [shape = 'u8[131072]{0}', space=vmem, size = 0x20000, scoped, tag = 'output window, operand 0']
    %8 = vsyncpa [#allocation3], 0
    %s9 = scalar_lea.sflag [#allocation3], 1
    %10 = vsyncpa %s9, 0
    %11 = vsyncpa [#allocation6], 0
    %12 = vsyncpa [#allocation4], 0
    %s13 = scalar_lea.sflag [#allocation4], 1
    %14 = vsyncpa %s13, 0
    loop: start=0, step=1, limit=10
    $region2: #{tpu_custom_call.1} parent=1 // loop_pre_header
      _
    $region3: #{tpu_custom_call.1} parent=1 // loop_header
      %s16 = sphi 0, %s20
      %p17 = scmp.ge.s32.totalorder %s16, 10
      %s23 = sphi 0, %s35
      %s24 = sphi 0, %s31
      %s25 = sphi 0, %s23
      %s26 = sphi 0, %s24
      %s27 = sphi 0, %s25
      %s28 = sphi 0, %s26
      %s38 = sphi 0, %s40
      %s41 = sphi 0, %s38
      %s42 = sphi 0, %s41
      %s58 = sphi 0, %s42
      %s64 = sphi 0, %s66
      %s67 = sphi 0, %s64
      %s68 = sphi 0, %s67
      %s84 = sphi 0, %s68
      %s90 = sphi 0, %s92
      %s93 = sphi 0, %s90
      %s94 = sphi 0, %s93
      %s110 = sphi 0, %s94
      %s118 = sphi 0, %s120
      %s121 = sphi 0, %s118
      %s122 = sphi 0, %s121
      %s138 = sphi 0, %s122
    $region4: #{tpu_custom_call.1} parent=1 // loop_header_branch
      %19 = sbr.rel (%p17) target = $region8
    $region5: #{tpu_custom_call.1} parent=1 // loop_body
      %s21 = ssub.s32 %s16, 1
      %s22 = ssub.s32 %s16, 2
      %s29 = sadd.s32 1, %s24
      %p30 = scmp.ge.s32.totalorder %s29, 1
      %s31 = scalar_select %p30, 0, %s29
      %s32 = sadd.s32 1, %s23
      %s33 = scalar_select %p30, %s32, %s23
      %p34 = scmp.ge.s32.totalorder %s33, 8
      %s35 = scalar_select %p34, 0, %s33
      %s36 = ssub.s32 %s23, %s35
      %p37 = scmp.eq.s32.totalorder %s36, 0
      %s39 = sadd.s32 %s38, 1
      %s40 = scalar_select %p37, %s38, %s39
      %p43 = pneg %p37
      %p44 = scmp.eq.s32.totalorder %s16, 7
      %p45 = por %p43, %p44
      %p46 = scmp.ne.s32.totalorder %s38, %s41
      %p47 = scmp.eq.s32.totalorder %s16, 0
      %p48 = por %p46, %p47
      %p49 = scmp.ne.s32.totalorder %s38, %s41
      %p50 = scmp.eq.s32.totalorder %s21, 7
      %p51 = por %p49, %p50
      %p52 = scmp.ne.s32.totalorder %s41, %s42
      %p53 = scmp.eq.s32.totalorder %s21, 0
      %p54 = por %p52, %p53
      %p55 = scmp.ne.s32.totalorder %s41, %s42
      %p56 = scmp.eq.s32.totalorder %s22, 7
      %p57 = por %p55, %p56
      %p59 = scmp.ne.s32.totalorder %s42, %s58
      %p60 = scmp.eq.s32.totalorder %s22, 0
      %p61 = por %p59, %p60
      %s62 = ssub.s32 %s24, %s31
      %p63 = scmp.eq.s32.totalorder %s62, 0
      %s65 = sadd.s32 %s64, 1
      %s66 = scalar_select %p63, %s64, %s65
      %p69 = pneg %p63
      %p70 = scmp.eq.s32.totalorder %s16, 7
      %p71 = por %p69, %p70
      %p72 = scmp.ne.s32.totalorder %s64, %s67
      %p73 = scmp.eq.s32.totalorder %s16, 0
      %p74 = por %p72, %p73
      %p75 = scmp.ne.s32.totalorder %s64, %s67
      %p76 = scmp.eq.s32.totalorder %s21, 7
      %p77 = por %p75, %p76
      %p78 = scmp.ne.s32.totalorder %s67, %s68
      %p79 = scmp.eq.s32.totalorder %s21, 0
      %p80 = por %p78, %p79
      %p81 = scmp.ne.s32.totalorder %s67, %s68
      %p82 = scmp.eq.s32.totalorder %s22, 7
      %p83 = por %p81, %p82
      %p85 = scmp.ne.s32.totalorder %s68, %s84
      %p86 = scmp.eq.s32.totalorder %s22, 0
      %p87 = por %p85, %p86
      %s88 = ssub.s32 %s24, %s31
      %p89 = scmp.eq.s32.totalorder %s88, 0
      %s91 = sadd.s32 %s90, 1
      %s92 = scalar_select %p89, %s90, %s91
      %p95 = pneg %p89
      %p96 = scmp.eq.s32.totalorder %s16, 7
      %p97 = por %p95, %p96
      %p98 = scmp.ne.s32.totalorder %s90, %s93
      %p99 = scmp.eq.s32.totalorder %s16, 0
      %p100 = por %p98, %p99
      %p101 = scmp.ne.s32.totalorder %s90, %s93
      %p102 = scmp.eq.s32.totalorder %s21, 7
      %p103 = por %p101, %p102
      %p104 = scmp.ne.s32.totalorder %s93, %s94
      %p105 = scmp.eq.s32.totalorder %s21, 0
      %p106 = por %p104, %p105
      %p107 = scmp.ne.s32.totalorder %s93, %s94
      %p108 = scmp.eq.s32.totalorder %s22, 7
      %p109 = por %p107, %p108
      %p111 = scmp.ne.s32.totalorder %s94, %s110
      %p112 = scmp.eq.s32.totalorder %s22, 0
      %p113 = por %p111, %p112
      %s114 = ssub.s32 %s23, %s35
      %s115 = ssub.s32 %s24, %s31
      %s116 = sor.u32 %s114, %s115
      %p117 = scmp.eq.s32.totalorder %s116, 0
      %s119 = sadd.s32 %s118, 1
      %s120 = scalar_select %p117, %s118, %s119
      %p123 = pneg %p117
      %p124 = scmp.eq.s32.totalorder %s16, 7
      %p125 = por %p123, %p124
      %p126 = scmp.ne.s32.totalorder %s118, %s121
      %p127 = scmp.eq.s32.totalorder %s16, 0
      %p128 = por %p126, %p127
      %p129 = scmp.ne.s32.totalorder %s118, %s121
      %p130 = scmp.eq.s32.totalorder %s21, 7
      %p131 = por %p129, %p130
      %p132 = scmp.ne.s32.totalorder %s121, %s122
      %p133 = scmp.eq.s32.totalorder %s21, 0
      %p134 = por %p132, %p133
      %p135 = scmp.ne.s32.totalorder %s121, %s122
      %p136 = scmp.eq.s32.totalorder %s22, 7
      %p137 = por %p135, %p136
      %p139 = scmp.ne.s32.totalorder %s122, %s138
      %p140 = scmp.eq.s32.totalorder %s22, 0
      %p141 = por %p139, %p140
      %p142 = scmp.le.s32.totalorder 1, %s16
      %p143 = scmp.lt.s32.totalorder %s16, 9
      %p144 = pnand %p142, %p143
      %p145 = pneg %p144
      // Predicated region
      $region9: #{tpu_custom_call.1} parent=5 // pred_check
        _
      $region10: #{tpu_custom_call.1} parent=5 // pred_check_branch
        %147 = sbr.rel (%p144) target = $region12
      $region11: #{tpu_custom_call.1} parent=5 // pred_region
        %s148 = ssub.s32 %s16, 1
        // Predicated region
        $region13: #{tpu_custom_call.1} parent=11 // pred_check
          %p149 = pneg %p80
        $region14: #{tpu_custom_call.1} parent=11 // pred_check_branch
          %151 = sbr.rel (%p149) target = $region16
        $region15: #{tpu_custom_call.1} parent=11 // pred_region
          %s153 = ssub.s32 2048, 2048
          %154 = vsyncadd [#allocation6], %s153
          %s155 = smul.addr %s26, 64
          %s156 = scalar_lea.hbm %s1, %s155
          %s157 = sshll.u32 [#allocation5], 4
          %s158 = int_to_ptr.vmem [resolvable:$true] %s157
          %163 = dma.hbm_to_vmem [thread:$0]  %s156, 2048, %s158, [#allocation6], 64, 64, 4
        $region16: #{tpu_custom_call.1} parent=11 // pred_fallthru
          _
        // Predicated region
        $region17: #{tpu_custom_call.1} parent=11 // pred_check
          %p164 = pneg %p106
        $region18: #{tpu_custom_call.1} parent=11 // pred_check_branch
          %166 = sbr.rel (%p164) target = $region20
        $region19: #{tpu_custom_call.1} parent=11 // pred_region
          %p167 = scmp.lt.s32.totalorder %s26, 0
          %s168 = scalar_select %p167, %s26, 0
          %s169 = scalar_lea.vmem %s2, %s168
        $region20: #{tpu_custom_call.1} parent=11 // pred_fallthru
          _
      $region12: #{tpu_custom_call.1} parent=5 // pred_fallthru
        _
      %p170 = scmp.lt.s32.totalorder %s16, 8
      // Predicated region
      $region21: #{tpu_custom_call.1} parent=5 // pred_check
        %p171 = pneg %p170
      $region22: #{tpu_custom_call.1} parent=5 // pred_check_branch
        %173 = sbr.rel (%p171) target = $region24
      $region23: #{tpu_custom_call.1} parent=5 // pred_region
        // Predicated region
        $region25: #{tpu_custom_call.1} parent=23 // pred_check
          %p174 = pneg %p48
        $region26: #{tpu_custom_call.1} parent=23 // pred_check_branch
          %176 = sbr.rel (%p174) target = $region28
        $region27: #{tpu_custom_call.1} parent=23 // pred_region
          %s177 = sand.u32 %s38, 1
          %s178 = scalar_lea.sflag [#allocation3], %s177
          %s179 = sand.u32 %s38, 1
          %s180 = smul.addr %s179, 256
          %s181 = scalar_lea.vmem [#allocation2], %s180
          %s182 = smul.u32 32, %s23
          %s184 = ssub.s32 4096, 4096
          %185 = vsyncadd %s178, %s184
          %s186 = smul.addr %s182, 2
          %s187 = smul.addr %s186, 64
          %s188 = scalar_lea.hbm %s0, %s187
          %s189 = sshll.u32 %s181, 4
          %s190 = int_to_ptr.vmem [resolvable:$true] %s189
          %195 = dma.hbm_to_vmem [thread:$0]  %s188, 4096, %s190, %s178, 128, 128, 8
        $region28: #{tpu_custom_call.1} parent=23 // pred_fallthru
          _
      $region24: #{tpu_custom_call.1} parent=5 // pred_fallthru
        _
      %p196 = scmp.le.s32.totalorder 1, %s16
      %p197 = scmp.lt.s32.totalorder %s16, 9
      %p198 = pnand %p196, %p197
      %p199 = pneg %p198
      // Predicated region
      $region29: #{tpu_custom_call.1} parent=5 // pred_check
        _
      $region30: #{tpu_custom_call.1} parent=5 // pred_check_branch
        %201 = sbr.rel (%p198) target = $region32
      $region31: #{tpu_custom_call.1} parent=5 // pred_region
        %s202 = ssub.s32 %s16, 1
        %s203 = sand.u32 %s41, 1
        %s204 = scalar_lea.sflag [#allocation3], %s203
        %s205 = sand.u32 %s41, 1
        %s206 = smul.addr %s205, 256
        %s207 = scalar_lea.vmem [#allocation2], %s206
        // Predicated region
        $region33: #{tpu_custom_call.1} parent=31 // pred_check
          %p208 = pneg %p54
        $region34: #{tpu_custom_call.1} parent=31 // pred_check_branch
          %210 = sbr.rel (%p208) target = $region36
        $region35: #{tpu_custom_call.1} parent=31 // pred_region
          %211 = dma.done %s204, 4096
        $region36: #{tpu_custom_call.1} parent=31 // pred_fallthru
          _
        // Predicated region
        $region37: #{tpu_custom_call.1} parent=31 // pred_check
          %p212 = pneg %p80
        $region38: #{tpu_custom_call.1} parent=31 // pred_check_branch
          %214 = sbr.rel (%p212) target = $region40
        $region39: #{tpu_custom_call.1} parent=31 // pred_region
          %215 = dma.done [#allocation6], 2048
        $region40: #{tpu_custom_call.1} parent=31 // pred_fallthru
          _
        %s216 = sand.u32 %s41, 1
        %s217 = scalar_lea.sflag [#allocation3], %s216
        %s218 = sand.u32 %s41, 1
        %s219 = smul.addr %s218, 256
        %s220 = scalar_lea.vmem [#allocation2], %s219
        %p221 = pneg %p54
        %p222 = pneg %p51
        %p223 = pneg %p80
        %p224 = pneg %p77
        %p225 = scmp.lt.s32.totalorder %s26, 0
        %s226 = scalar_select %p225, %s26, 0
        %s227 = scalar_lea.vmem %s2, %s226
        %p228 = pneg %p106
        %p229 = pneg %p103
        %p230 = pneg %p134
        %p231 = pneg %p131
        %s232 = sand.u32 %s121, 1
        %s233 = scalar_lea.sflag [#allocation4], %s232
        %s234 = sand.u32 %s121, 1
        %s235 = smul.addr %s234, 128
        %s236 = scalar_lea.vmem [#allocation7], %s235
        %s237 = smul.u32 32, %s25
        %p238 = scmp.lt.s32.totalorder %s26, 0
        %s239 = scalar_select %p238, %s26, 0
        %s240 = scalar_lea.vmem %s2, %s239
        %s241 = smul.u32 32, %s25
        %v243 = vld [vmem:[%s207] sm:$0xff]
        %v244 = vld [vmem:[%s207 + $0x8] sm:$0xff]
        %v245 = vld [vmem:[%s207 + $0x10] sm:$0xff]
        %v246 = vld [vmem:[%s207 + $0x18] sm:$0xff]
        %v247 = vld [vmem:[%s207 + $0x20] sm:$0xff]
        %v248 = vld [vmem:[%s207 + $0x28] sm:$0xff]
        %v249 = vld [vmem:[%s207 + $0x30] sm:$0xff]
        %v250 = vld [vmem:[%s207 + $0x38] sm:$0xff]
        %v251 = vld [vmem:[%s207 + $0x40] sm:$0xff]
        %v252 = vld [vmem:[%s207 + $0x48] sm:$0xff]
        %v253 = vld [vmem:[%s207 + $0x50] sm:$0xff]
        %v254 = vld [vmem:[%s207 + $0x58] sm:$0xff]
        %v255 = vld [vmem:[%s207 + $0x60] sm:$0xff]
        %v256 = vld [vmem:[%s207 + $0x68] sm:$0xff]
        %v257 = vld [vmem:[%s207 + $0x70] sm:$0xff]
        %v258 = vld [vmem:[%s207 + $0x78] sm:$0xff]
        %v259 = vld [vmem:[%s207 + $0x80] sm:$0xff]
        %v260 = vld [vmem:[%s207 + $0x88] sm:$0xff]
        %v261 = vld [vmem:[%s207 + $0x90] sm:$0xff]
        %v262 = vld [vmem:[%s207 + $0x98] sm:$0xff]
        %v263 = vld [vmem:[%s207 + $0xa0] sm:$0xff]
        %v264 = vld [vmem:[%s207 + $0xa8] sm:$0xff]
        %v265 = vld [vmem:[%s207 + $0xb0] sm:$0xff]
        %v266 = vld [vmem:[%s207 + $0xb8] sm:$0xff]
        %v267 = vld [vmem:[%s207 + $0xc0] sm:$0xff]
        %v268 = vld [vmem:[%s207 + $0xc8] sm:$0xff]
        %v269 = vld [vmem:[%s207 + $0xd0] sm:$0xff]
        %v270 = vld [vmem:[%s207 + $0xd8] sm:$0xff]
        %v271 = vld [vmem:[%s207 + $0xe0] sm:$0xff]
        %v272 = vld [vmem:[%s207 + $0xe8] sm:$0xff]
        %v273 = vld [vmem:[%s207 + $0xf0] sm:$0xff]
        %v274 = vld [vmem:[%s207 + $0xf8] sm:$0xff]
        %v275 = vld [vmem:[#allocation5] sm:$0xf]
        %v276 = vld [vmem:[#allocation5 + $0x4] sm:$0xf]
        %v277 = vld [vmem:[#allocation5 + $0x8] sm:$0xf]
        %v278 = vld [vmem:[#allocation5 + $0xc] sm:$0xf]
        %v279 = vld [vmem:[#allocation5 + $0x10] sm:$0xf]
        %v280 = vld [vmem:[#allocation5 + $0x14] sm:$0xf]
        %v281 = vld [vmem:[#allocation5 + $0x18] sm:$0xf]
        %v282 = vld [vmem:[#allocation5 + $0x1c] sm:$0xf]
        %v283 = vld [vmem:[#allocation5 + $0x20] sm:$0xf]
        %v284 = vld [vmem:[#allocation5 + $0x24] sm:$0xf]
        %v285 = vld [vmem:[#allocation5 + $0x28] sm:$0xf]
        %v286 = vld [vmem:[#allocation5 + $0x2c] sm:$0xf]
        %v287 = vld [vmem:[#allocation5 + $0x30] sm:$0xf]
        %v288 = vld [vmem:[#allocation5 + $0x34] sm:$0xf]
        %v289 = vld [vmem:[#allocation5 + $0x38] sm:$0xf]
        %v290 = vld [vmem:[#allocation5 + $0x3c] sm:$0xf]
        %v291 = vld [vmem:[#allocation5 + $0x40] sm:$0xf]
        %v292 = vld [vmem:[#allocation5 + $0x44] sm:$0xf]
        %v293 = vld [vmem:[#allocation5 + $0x48] sm:$0xf]
        %v294 = vld [vmem:[#allocation5 + $0x4c] sm:$0xf]
        %v295 = vld [vmem:[#allocation5 + $0x50] sm:$0xf]
        %v296 = vld [vmem:[#allocation5 + $0x54] sm:$0xf]
        %v297 = vld [vmem:[#allocation5 + $0x58] sm:$0xf]
        %v298 = vld [vmem:[#allocation5 + $0x5c] sm:$0xf]
        %v299 = vld [vmem:[#allocation5 + $0x60] sm:$0xf]
        %v300 = vld [vmem:[#allocation5 + $0x64] sm:$0xf]
        %v301 = vld [vmem:[#allocation5 + $0x68] sm:$0xf]
        %v302 = vld [vmem:[#allocation5 + $0x6c] sm:$0xf]
        %v303 = vld [vmem:[#allocation5 + $0x70] sm:$0xf]
        %v304 = vld [vmem:[#allocation5 + $0x74] sm:$0xf]
        %v305 = vld [vmem:[#allocation5 + $0x78] sm:$0xf]
        %v306 = vld [vmem:[#allocation5 + $0x7c] sm:$0xf]
        %v307 = vld [vmem:[%s240] sm:$0x1]
        %v309 = vlaneseq
        %v310 = vshrl.u32 %v309, 7
        %v311 = vsub.s32 0, %v310
        %v312 = vrot.slane %v307, %v311
        %v346 = vunpack.c.l.b16 %v243
        %v347 = vunpack.c.h.b16 %v243
        %v348 = vunpack.c.l.b16 %v244
        %v349 = vunpack.c.h.b16 %v244
        %v350 = vunpack.c.l.b16 %v245
        %v351 = vunpack.c.h.b16 %v245
        %v352 = vunpack.c.l.b16 %v246
        %v353 = vunpack.c.h.b16 %v246
        %v354 = vunpack.c.l.b16 %v247
        %v355 = vunpack.c.h.b16 %v247
        %v356 = vunpack.c.l.b16 %v248
        %v357 = vunpack.c.h.b16 %v248
        %v358 = vunpack.c.l.b16 %v249
        %v359 = vunpack.c.h.b16 %v249
        %v360 = vunpack.c.l.b16 %v250
        %v361 = vunpack.c.h.b16 %v250
        %v362 = vunpack.c.l.b16 %v251
        %v363 = vunpack.c.h.b16 %v251
        %v364 = vunpack.c.l.b16 %v252
        %v365 = vunpack.c.h.b16 %v252
        %v366 = vunpack.c.l.b16 %v253
        %v367 = vunpack.c.h.b16 %v253
        %v368 = vunpack.c.l.b16 %v254
        %v369 = vunpack.c.h.b16 %v254
        %v370 = vunpack.c.l.b16 %v255
        %v371 = vunpack.c.h.b16 %v255
        %v372 = vunpack.c.l.b16 %v256
        %v373 = vunpack.c.h.b16 %v256
        %v374 = vunpack.c.l.b16 %v257
        %v375 = vunpack.c.h.b16 %v257
        %v376 = vunpack.c.l.b16 %v258
        %v377 = vunpack.c.h.b16 %v258
        %v378 = vunpack.c.l.b16 %v259
        %v379 = vunpack.c.h.b16 %v259
        %v380 = vunpack.c.l.b16 %v260
        %v381 = vunpack.c.h.b16 %v260
        %v382 = vunpack.c.l.b16 %v261
        %v383 = vunpack.c.h.b16 %v261
        %v384 = vunpack.c.l.b16 %v262
        %v385 = vunpack.c.h.b16 %v262
        %v386 = vunpack.c.l.b16 %v263
        %v387 = vunpack.c.h.b16 %v263
        %v388 = vunpack.c.l.b16 %v264
        %v389 = vunpack.c.h.b16 %v264
        %v390 = vunpack.c.l.b16 %v265
        %v391 = vunpack.c.h.b16 %v265
        %v392 = vunpack.c.l.b16 %v266
        %v393 = vunpack.c.h.b16 %v266
        %v394 = vunpack.c.l.b16 %v267
        %v395 = vunpack.c.h.b16 %v267
        %v396 = vunpack.c.l.b16 %v268
        %v397 = vunpack.c.h.b16 %v268
        %v398 = vunpack.c.l.b16 %v269
        %v399 = vunpack.c.h.b16 %v269
        %v400 = vunpack.c.l.b16 %v270
        %v401 = vunpack.c.h.b16 %v270
        %v402 = vunpack.c.l.b16 %v271
        %v403 = vunpack.c.h.b16 %v271
        %v404 = vunpack.c.l.b16 %v272
        %v405 = vunpack.c.h.b16 %v272
        %v406 = vunpack.c.l.b16 %v273
        %v407 = vunpack.c.h.b16 %v273
        %v408 = vunpack.c.l.b16 %v274
        %v409 = vunpack.c.h.b16 %v274
        %v410 = vpack.c.b16 %v348, %v346
        %v411 = vpack.c.b16 %v349, %v347
        %v412 = vpack.c.b16 %v352, %v350
        %v413 = vpack.c.b16 %v353, %v351
        %v414 = vpack.c.b16 %v356, %v354
        %v415 = vpack.c.b16 %v357, %v355
        %v416 = vpack.c.b16 %v360, %v358
        %v417 = vpack.c.b16 %v361, %v359
        %v418 = vpack.c.b16 %v364, %v362
        %v419 = vpack.c.b16 %v365, %v363
        %v420 = vpack.c.b16 %v368, %v366
        %v421 = vpack.c.b16 %v369, %v367
        %v422 = vpack.c.b16 %v372, %v370
        %v423 = vpack.c.b16 %v373, %v371
        %v424 = vpack.c.b16 %v376, %v374
        %v425 = vpack.c.b16 %v377, %v375
        %v426 = vpack.c.b16 %v380, %v378
        %v427 = vpack.c.b16 %v381, %v379
        %v428 = vpack.c.b16 %v384, %v382
        %v429 = vpack.c.b16 %v385, %v383
        %v430 = vpack.c.b16 %v388, %v386
        %v431 = vpack.c.b16 %v389, %v387
        %v432 = vpack.c.b16 %v392, %v390
        %v433 = vpack.c.b16 %v393, %v391
        %v434 = vpack.c.b16 %v396, %v394
        %v435 = vpack.c.b16 %v397, %v395
        %v436 = vpack.c.b16 %v400, %v398
        %v437 = vpack.c.b16 %v401, %v399
        %v438 = vpack.c.b16 %v404, %v402
        %v439 = vpack.c.b16 %v405, %v403
        %v440 = vpack.c.b16 %v408, %v406
        %v441 = vpack.c.b16 %v409, %v407
        %v506 = vunpack.c.l.b16 %v275
        %v507 = vunpack.c.l.b16 %v276
        %v508 = vunpack.c.l.b16 %v277
        %v509 = vunpack.c.l.b16 %v278
        %v510 = vunpack.c.l.b16 %v279
        %v511 = vunpack.c.l.b16 %v280
        %v512 = vunpack.c.l.b16 %v281
        %v513 = vunpack.c.l.b16 %v282
        %v514 = vunpack.c.l.b16 %v283
        %v515 = vunpack.c.l.b16 %v284
        %v516 = vunpack.c.l.b16 %v285
        %v517 = vunpack.c.l.b16 %v286
        %v518 = vunpack.c.l.b16 %v287
        %v519 = vunpack.c.l.b16 %v288
        %v520 = vunpack.c.l.b16 %v289
        %v521 = vunpack.c.l.b16 %v290
        %v522 = vunpack.c.l.b16 %v291
        %v523 = vunpack.c.l.b16 %v292
        %v524 = vunpack.c.l.b16 %v293
        %v525 = vunpack.c.l.b16 %v294
        %v526 = vunpack.c.l.b16 %v295
        %v527 = vunpack.c.l.b16 %v296
        %v528 = vunpack.c.l.b16 %v297
        %v529 = vunpack.c.l.b16 %v298
        %v530 = vunpack.c.l.b16 %v299
        %v531 = vunpack.c.l.b16 %v300
        %v532 = vunpack.c.l.b16 %v301
        %v533 = vunpack.c.l.b16 %v302
        %v534 = vunpack.c.l.b16 %v303
        %v535 = vunpack.c.l.b16 %v304
        %v536 = vunpack.c.l.b16 %v305
        %v537 = vunpack.c.l.b16 %v306
        %v538 = vpack.c.b16 %v507, %v506
        %v539 = vpack.c.b16 %v509, %v508
        %v540 = vpack.c.b16 %v511, %v510
        %v541 = vpack.c.b16 %v513, %v512
        %v542 = vpack.c.b16 %v515, %v514
        %v543 = vpack.c.b16 %v517, %v516
        %v544 = vpack.c.b16 %v519, %v518
        %v545 = vpack.c.b16 %v521, %v520
        %v546 = vpack.c.b16 %v523, %v522
        %v547 = vpack.c.b16 %v525, %v524
        %v548 = vpack.c.b16 %v527, %v526
        %v549 = vpack.c.b16 %v529, %v528
        %v550 = vpack.c.b16 %v531, %v530
        %v551 = vpack.c.b16 %v533, %v532
        %v552 = vpack.c.b16 %v535, %v534
        %v553 = vpack.c.b16 %v537, %v536
        %570 = vmatprep.subr.bf16.mxu0 0
        %571 = vmatpush1.bf16.msra.mxu0 %v545
        %572 = vmatprep.subr.bf16.mxu0 0
        %573 = vmatpush1.bf16.msra.mxu0 %v544
        %574 = vmatprep.subr.bf16.mxu0 0
        %575 = vmatpush1.bf16.msra.mxu0 %v543
        %576 = vmatprep.subr.bf16.mxu0 0
        %577 = vmatpush1.bf16.msra.mxu0 %v542
        %578 = vmatprep.subr.bf16.mxu0 0
        %579 = vmatpush1.bf16.msra.mxu0 %v541
        %580 = vmatprep.subr.bf16.mxu0 0
        %581 = vmatpush1.bf16.msra.mxu0 %v540
        %582 = vmatprep.subr.bf16.mxu0 0
        %583 = vmatpush1.bf16.msra.mxu0 %v539
        %584 = vmatprep.subr.bf16.mxu0 0
        %585 = vmatpush1.bf16.msra.mxu0 %v538
        %586 = vmatprep.subr.bf16.mxu0 0
        %587 = vmatpush2.bf16.msra.mxu0 %v553
        %588 = vmatprep.subr.bf16.mxu0 0
        %589 = vmatpush2.bf16.msra.mxu0 %v552
        %590 = vmatprep.subr.bf16.mxu0 0
        %591 = vmatpush2.bf16.msra.mxu0 %v551
        %592 = vmatprep.subr.bf16.mxu0 0
        %593 = vmatpush2.bf16.msra.mxu0 %v550
        %594 = vmatprep.subr.bf16.mxu0 0
        %595 = vmatpush2.bf16.msra.mxu0 %v549
        %596 = vmatprep.subr.bf16.mxu0 0
        %597 = vmatpush2.bf16.msra.mxu0 %v548
        %598 = vmatprep.subr.bf16.mxu0 0
        %599 = vmatpush2.bf16.msra.mxu0 %v547
        %600 = vmatprep.subr.bf16.mxu0 0
        %601 = vmatpush2.bf16.msra.mxu0 %v546
        %602 = vmatprep.mubr.bf16.mxu0 %v411
        %603 = vmatmul.mubr.bf16.gmra.mxu0 %v410
        %v604 = vpop.f32.mrf.mxu0
        %v605 = vadd.f32 %v312, %v604
        %v606 = vpop.f32.mrf.mxu0
        %v607 = vpop.f32.mrf.mxu0
        %v608 = vadd.f32 %v312, %v607
        %v609 = vpop.f32.mrf.mxu0
        %610 = vmatprep.mubr.bf16.mxu0 %v413
        %611 = vmatmul.mubr.bf16.gmra.mxu0 %v412
        %v612 = vpop.f32.mrf.mxu0
        %v613 = vadd.f32 %v312, %v612
        %v614 = vpop.f32.mrf.mxu0
        %v615 = vpop.f32.mrf.mxu0
        %v616 = vadd.f32 %v312, %v615
        %v617 = vpop.f32.mrf.mxu0
        %618 = vmatprep.mubr.bf16.mxu0 %v415
        %619 = vmatmul.mubr.bf16.gmra.mxu0 %v414
        %v620 = vpop.f32.mrf.mxu0
        %v621 = vadd.f32 %v312, %v620
        %v622 = vpop.f32.mrf.mxu0
        %v623 = vpop.f32.mrf.mxu0
        %v624 = vadd.f32 %v312, %v623
        %v625 = vpop.f32.mrf.mxu0
        %626 = vmatprep.mubr.bf16.mxu0 %v417
        %627 = vmatmul.mubr.bf16.gmra.mxu0 %v416
        %v628 = vpop.f32.mrf.mxu0
        %v629 = vadd.f32 %v312, %v628
        %v630 = vpop.f32.mrf.mxu0
        %v631 = vpop.f32.mrf.mxu0
        %v632 = vadd.f32 %v312, %v631
        %v633 = vpop.f32.mrf.mxu0
        %634 = vmatprep.mubr.bf16.mxu0 %v419
        %635 = vmatmul.mubr.bf16.gmra.mxu0 %v418
        %v636 = vpop.f32.mrf.mxu0
        %v637 = vadd.f32 %v312, %v636
        %v638 = vpop.f32.mrf.mxu0
        %v639 = vpop.f32.mrf.mxu0
        %v640 = vadd.f32 %v312, %v639
        %v641 = vpop.f32.mrf.mxu0
        %642 = vmatprep.mubr.bf16.mxu0 %v421
        %643 = vmatmul.mubr.bf16.gmra.mxu0 %v420
        %v644 = vpop.f32.mrf.mxu0
        %v645 = vadd.f32 %v312, %v644
        %v646 = vpop.f32.mrf.mxu0
        %v647 = vpop.f32.mrf.mxu0
        %v648 = vadd.f32 %v312, %v647
        %v649 = vpop.f32.mrf.mxu0
        %650 = vmatprep.mubr.bf16.mxu0 %v423
        %651 = vmatmul.mubr.bf16.gmra.mxu0 %v422
        %v652 = vpop.f32.mrf.mxu0
        %v653 = vadd.f32 %v312, %v652
        %v654 = vpop.f32.mrf.mxu0
        %v655 = vpop.f32.mrf.mxu0
        %v656 = vadd.f32 %v312, %v655
        %v657 = vpop.f32.mrf.mxu0
        %658 = vmatprep.mubr.bf16.mxu0 %v425
        %659 = vmatmul.mubr.bf16.gmra.mxu0 %v424
        %v660 = vpop.f32.mrf.mxu0
        %v661 = vadd.f32 %v312, %v660
        %v662 = vpop.f32.mrf.mxu0
        %v663 = vpop.f32.mrf.mxu0
        %v664 = vadd.f32 %v312, %v663
        %v665 = vpop.f32.mrf.mxu0
        %666 = vmatprep.mubr.bf16.mxu0 %v427
        %667 = vmatmul.mubr.bf16.gmra.mxu0 %v426
        %v668 = vpop.f32.mrf.mxu0
        %v669 = vadd.f32 %v312, %v668
        %v670 = vpop.f32.mrf.mxu0
        %v671 = vpop.f32.mrf.mxu0
        %v672 = vadd.f32 %v312, %v671
        %v673 = vpop.f32.mrf.mxu0
        %674 = vmatprep.mubr.bf16.mxu0 %v429
        %675 = vmatmul.mubr.bf16.gmra.mxu0 %v428
        %v676 = vpop.f32.mrf.mxu0
        %v677 = vadd.f32 %v312, %v676
        %v678 = vpop.f32.mrf.mxu0
        %v679 = vpop.f32.mrf.mxu0
        %v680 = vadd.f32 %v312, %v679
        %v681 = vpop.f32.mrf.mxu0
        %682 = vmatprep.mubr.bf16.mxu0 %v431
        %683 = vmatmul.mubr.bf16.gmra.mxu0 %v430
        %v684 = vpop.f32.mrf.mxu0
        %v685 = vadd.f32 %v312, %v684
        %v686 = vpop.f32.mrf.mxu0
        %v687 = vpop.f32.mrf.mxu0
        %v688 = vadd.f32 %v312, %v687
        %v689 = vpop.f32.mrf.mxu0
        %690 = vmatprep.mubr.bf16.mxu0 %v433
        %691 = vmatmul.mubr.bf16.gmra.mxu0 %v432
        %v692 = vpop.f32.mrf.mxu0
        %v693 = vadd.f32 %v312, %v692
        %v694 = vpop.f32.mrf.mxu0
        %v695 = vpop.f32.mrf.mxu0
        %v696 = vadd.f32 %v312, %v695
        %v697 = vpop.f32.mrf.mxu0
        %698 = vmatprep.mubr.bf16.mxu0 %v435
        %699 = vmatmul.mubr.bf16.gmra.mxu0 %v434
        %v700 = vpop.f32.mrf.mxu0
        %v701 = vadd.f32 %v312, %v700
        %v702 = vpop.f32.mrf.mxu0
        %v703 = vpop.f32.mrf.mxu0
        %v704 = vadd.f32 %v312, %v703
        %v705 = vpop.f32.mrf.mxu0
        %706 = vmatprep.mubr.bf16.mxu0 %v437
        %707 = vmatmul.mubr.bf16.gmra.mxu0 %v436
        %v708 = vpop.f32.mrf.mxu0
        %v709 = vadd.f32 %v312, %v708
        %v710 = vpop.f32.mrf.mxu0
        %v711 = vpop.f32.mrf.mxu0
        %v712 = vadd.f32 %v312, %v711
        %v713 = vpop.f32.mrf.mxu0
        %714 = vmatprep.mubr.bf16.mxu0 %v439
        %715 = vmatmul.mubr.bf16.gmra.mxu0 %v438
        %v716 = vpop.f32.mrf.mxu0
        %v717 = vadd.f32 %v312, %v716
        %v718 = vpop.f32.mrf.mxu0
        %v719 = vpop.f32.mrf.mxu0
        %v720 = vadd.f32 %v312, %v719
        %v721 = vpop.f32.mrf.mxu0
        %722 = vmatprep.mubr.bf16.mxu0 %v441
        %723 = vmatmul.mubr.bf16.gmra.mxu0 %v440
        %v724 = vpop.f32.mrf.mxu0
        %v725 = vadd.f32 %v312, %v724
        %v726 = vpop.f32.mrf.mxu0
        %v727 = vpop.f32.mrf.mxu0
        %v728 = vadd.f32 %v312, %v727
        %v729 = vpop.f32.mrf.mxu0
        %730 = vdwg.mxu0
        %vm731 = vcmp.gt.f32.partialorder %v605, 0.0
        %vm732 = vcmp.gt.f32.partialorder %v608, 0.0
        %vm733 = vcmp.gt.f32.partialorder %v613, 0.0
        %vm734 = vcmp.gt.f32.partialorder %v616, 0.0
        %vm735 = vcmp.gt.f32.partialorder %v621, 0.0
        %vm736 = vcmp.gt.f32.partialorder %v624, 0.0
        %vm737 = vcmp.gt.f32.partialorder %v629, 0.0
        %vm738 = vcmp.gt.f32.partialorder %v632, 0.0
        %vm739 = vcmp.gt.f32.partialorder %v637, 0.0
        %vm740 = vcmp.gt.f32.partialorder %v640, 0.0
        %vm741 = vcmp.gt.f32.partialorder %v645, 0.0
        %vm742 = vcmp.gt.f32.partialorder %v648, 0.0
        %vm743 = vcmp.gt.f32.partialorder %v653, 0.0
        %vm744 = vcmp.gt.f32.partialorder %v656, 0.0
        %vm745 = vcmp.gt.f32.partialorder %v661, 0.0
        %vm746 = vcmp.gt.f32.partialorder %v664, 0.0
        %vm747 = vcmp.gt.f32.partialorder %v669, 0.0
        %vm748 = vcmp.gt.f32.partialorder %v672, 0.0
        %vm749 = vcmp.gt.f32.partialorder %v677, 0.0
        %vm750 = vcmp.gt.f32.partialorder %v680, 0.0
        %vm751 = vcmp.gt.f32.partialorder %v685, 0.0
        %vm752 = vcmp.gt.f32.partialorder %v688, 0.0
        %vm753 = vcmp.gt.f32.partialorder %v693, 0.0
        %vm754 = vcmp.gt.f32.partialorder %v696, 0.0
        %vm755 = vcmp.gt.f32.partialorder %v701, 0.0
        %vm756 = vcmp.gt.f32.partialorder %v704, 0.0
        %vm757 = vcmp.gt.f32.partialorder %v709, 0.0
        %vm758 = vcmp.gt.f32.partialorder %v712, 0.0
        %vm759 = vcmp.gt.f32.partialorder %v717, 0.0
        %vm760 = vcmp.gt.f32.partialorder %v720, 0.0
        %vm761 = vcmp.gt.f32.partialorder %v725, 0.0
        %vm762 = vcmp.gt.f32.partialorder %v728, 0.0
        %v763 = vmul.f32 %v605, 0.1
        %v764 = vmul.f32 %v608, 0.1
        %v765 = vmul.f32 %v613, 0.1
        %v766 = vmul.f32 %v616, 0.1
        %v767 = vmul.f32 %v621, 0.1
        %v768 = vmul.f32 %v624, 0.1
        %v769 = vmul.f32 %v629, 0.1
        %v770 = vmul.f32 %v632, 0.1
        %v771 = vmul.f32 %v637, 0.1
        %v772 = vmul.f32 %v640, 0.1
        %v773 = vmul.f32 %v645, 0.1
        %v774 = vmul.f32 %v648, 0.1
        %v775 = vmul.f32 %v653, 0.1
        %v776 = vmul.f32 %v656, 0.1
        %v777 = vmul.f32 %v661, 0.1
        %v778 = vmul.f32 %v664, 0.1
        %v779 = vmul.f32 %v669, 0.1
        %v780 = vmul.f32 %v672, 0.1
        %v781 = vmul.f32 %v677, 0.1
        %v782 = vmul.f32 %v680, 0.1
        %v783 = vmul.f32 %v685, 0.1
        %v784 = vmul.f32 %v688, 0.1
        %v785 = vmul.f32 %v693, 0.1
        %v786 = vmul.f32 %v696, 0.1
        %v787 = vmul.f32 %v701, 0.1
        %v788 = vmul.f32 %v704, 0.1
        %v789 = vmul.f32 %v709, 0.1
        %v790 = vmul.f32 %v712, 0.1
        %v791 = vmul.f32 %v717, 0.1
        %v792 = vmul.f32 %v720, 0.1
        %v793 = vmul.f32 %v725, 0.1
        %v794 = vmul.f32 %v728, 0.1
        %v795 = vsel %vm731, %v605, %v763
        %v796 = vsel %vm732, %v608, %v764
        %v797 = vsel %vm733, %v613, %v765
        %v798 = vsel %vm734, %v616, %v766
        %v799 = vsel %vm735, %v621, %v767
        %v800 = vsel %vm736, %v624, %v768
        %v801 = vsel %vm737, %v629, %v769
        %v802 = vsel %vm738, %v632, %v770
        %v803 = vsel %vm739, %v637, %v771
        %v804 = vsel %vm740, %v640, %v772
        %v805 = vsel %vm741, %v645, %v773
        %v806 = vsel %vm742, %v648, %v774
        %v807 = vsel %vm743, %v653, %v775
        %v808 = vsel %vm744, %v656, %v776
        %v809 = vsel %vm745, %v661, %v777
        %v810 = vsel %vm746, %v664, %v778
        %v811 = vsel %vm747, %v669, %v779
        %v812 = vsel %vm748, %v672, %v780
        %v813 = vsel %vm749, %v677, %v781
        %v814 = vsel %vm750, %v680, %v782
        %v815 = vsel %vm751, %v685, %v783
        %v816 = vsel %vm752, %v688, %v784
        %v817 = vsel %vm753, %v693, %v785
        %v818 = vsel %vm754, %v696, %v786
        %v819 = vsel %vm755, %v701, %v787
        %v820 = vsel %vm756, %v704, %v788
        %v821 = vsel %vm757, %v709, %v789
        %v822 = vsel %vm758, %v712, %v790
        %v823 = vsel %vm759, %v717, %v791
        %v824 = vsel %vm760, %v720, %v792
        %v825 = vsel %vm761, %v725, %v793
        %v826 = vsel %vm762, %v728, %v794
        %v827 = vpack.c.bf16 %v796, %v795
        %v828 = vpack.c.bf16 %v798, %v797
        %v829 = vpack.c.bf16 %v800, %v799
        %v830 = vpack.c.bf16 %v802, %v801
        %v831 = vpack.c.bf16 %v804, %v803
        %v832 = vpack.c.bf16 %v806, %v805
        %v833 = vpack.c.bf16 %v808, %v807
        %v834 = vpack.c.bf16 %v810, %v809
        %v835 = vpack.c.bf16 %v812, %v811
        %v836 = vpack.c.bf16 %v814, %v813
        %v837 = vpack.c.bf16 %v816, %v815
        %v838 = vpack.c.bf16 %v818, %v817
        %v839 = vpack.c.bf16 %v820, %v819
        %v840 = vpack.c.bf16 %v822, %v821
        %v841 = vpack.c.bf16 %v824, %v823
        %v842 = vpack.c.bf16 %v826, %v825
        %v859 = vunpack.c.l.b16 %v827
        %v860 = vunpack.c.h.b16 %v827
        %v861 = vunpack.c.l.b16 %v828
        %v862 = vunpack.c.h.b16 %v828
        %v863 = vunpack.c.l.b16 %v829
        %v864 = vunpack.c.h.b16 %v829
        %v865 = vunpack.c.l.b16 %v830
        %v866 = vunpack.c.h.b16 %v830
        %v867 = vunpack.c.l.b16 %v831
        %v868 = vunpack.c.h.b16 %v831
        %v869 = vunpack.c.l.b16 %v832
        %v870 = vunpack.c.h.b16 %v832
        %v871 = vunpack.c.l.b16 %v833
        %v872 = vunpack.c.h.b16 %v833
        %v873 = vunpack.c.l.b16 %v834
        %v874 = vunpack.c.h.b16 %v834
        %v875 = vunpack.c.l.b16 %v835
        %v876 = vunpack.c.h.b16 %v835
        %v877 = vunpack.c.l.b16 %v836
        %v878 = vunpack.c.h.b16 %v836
        %v879 = vunpack.c.l.b16 %v837
        %v880 = vunpack.c.h.b16 %v837
        %v881 = vunpack.c.l.b16 %v838
        %v882 = vunpack.c.h.b16 %v838
        %v883 = vunpack.c.l.b16 %v839
        %v884 = vunpack.c.h.b16 %v839
        %v885 = vunpack.c.l.b16 %v840
        %v886 = vunpack.c.h.b16 %v840
        %v887 = vunpack.c.l.b16 %v841
        %v888 = vunpack.c.h.b16 %v841
        %v889 = vunpack.c.l.b16 %v842
        %v890 = vunpack.c.h.b16 %v842
        %v891 = vpack.c.b16 %v859, %v859
        %v892 = vpack.c.b16 %v860, %v860
        %v893 = vpack.c.b16 %v861, %v861
        %v894 = vpack.c.b16 %v862, %v862
        %v895 = vpack.c.b16 %v863, %v863
        %v896 = vpack.c.b16 %v864, %v864
        %v897 = vpack.c.b16 %v865, %v865
        %v898 = vpack.c.b16 %v866, %v866
        %v899 = vpack.c.b16 %v867, %v867
        %v900 = vpack.c.b16 %v868, %v868
        %v901 = vpack.c.b16 %v869, %v869
        %v902 = vpack.c.b16 %v870, %v870
        %v903 = vpack.c.b16 %v871, %v871
        %v904 = vpack.c.b16 %v872, %v872
        %v905 = vpack.c.b16 %v873, %v873
        %v906 = vpack.c.b16 %v874, %v874
        %v907 = vpack.c.b16 %v875, %v875
        %v908 = vpack.c.b16 %v876, %v876
        %v909 = vpack.c.b16 %v877, %v877
        %v910 = vpack.c.b16 %v878, %v878
        %v911 = vpack.c.b16 %v879, %v879
        %v912 = vpack.c.b16 %v880, %v880
        %v913 = vpack.c.b16 %v881, %v881
        %v914 = vpack.c.b16 %v882, %v882
        %v915 = vpack.c.b16 %v883, %v883
        %v916 = vpack.c.b16 %v884, %v884
        %v917 = vpack.c.b16 %v885, %v885
        %v918 = vpack.c.b16 %v886, %v886
        %v919 = vpack.c.b16 %v887, %v887
        %v920 = vpack.c.b16 %v888, %v888
        %v921 = vpack.c.b16 %v889, %v889
        %v922 = vpack.c.b16 %v890, %v890
        %955 = vst [vmem:[%s236] sm:$0xf] %v891
        %956 = vst [vmem:[%s236 + $0x4] sm:$0xf] %v892
        %957 = vst [vmem:[%s236 + $0x8] sm:$0xf] %v893
        %958 = vst [vmem:[%s236 + $0xc] sm:$0xf] %v894
        %959 = vst [vmem:[%s236 + $0x10] sm:$0xf] %v895
        %960 = vst [vmem:[%s236 + $0x14] sm:$0xf] %v896
        %961 = vst [vmem:[%s236 + $0x18] sm:$0xf] %v897
        %962 = vst [vmem:[%s236 + $0x1c] sm:$0xf] %v898
        %963 = vst [vmem:[%s236 + $0x20] sm:$0xf] %v899
        %964 = vst [vmem:[%s236 + $0x24] sm:$0xf] %v900
        %965 = vst [vmem:[%s236 + $0x28] sm:$0xf] %v901
        %966 = vst [vmem:[%s236 + $0x2c] sm:$0xf] %v902
        %967 = vst [vmem:[%s236 + $0x30] sm:$0xf] %v903
        %968 = vst [vmem:[%s236 + $0x34] sm:$0xf] %v904
        %969 = vst [vmem:[%s236 + $0x38] sm:$0xf] %v905
        %970 = vst [vmem:[%s236 + $0x3c] sm:$0xf] %v906
        %971 = vst [vmem:[%s236 + $0x40] sm:$0xf] %v907
        %972 = vst [vmem:[%s236 + $0x44] sm:$0xf] %v908
        %973 = vst [vmem:[%s236 + $0x48] sm:$0xf] %v909
        %974 = vst [vmem:[%s236 + $0x4c] sm:$0xf] %v910
        %975 = vst [vmem:[%s236 + $0x50] sm:$0xf] %v911
        %976 = vst [vmem:[%s236 + $0x54] sm:$0xf] %v912
        %977 = vst [vmem:[%s236 + $0x58] sm:$0xf] %v913
        %978 = vst [vmem:[%s236 + $0x5c] sm:$0xf] %v914
        %979 = vst [vmem:[%s236 + $0x60] sm:$0xf] %v915
        %980 = vst [vmem:[%s236 + $0x64] sm:$0xf] %v916
        %981 = vst [vmem:[%s236 + $0x68] sm:$0xf] %v917
        %982 = vst [vmem:[%s236 + $0x6c] sm:$0xf] %v918
        %983 = vst [vmem:[%s236 + $0x70] sm:$0xf] %v919
        %984 = vst [vmem:[%s236 + $0x74] sm:$0xf] %v920
        %985 = vst [vmem:[%s236 + $0x78] sm:$0xf] %v921
        %986 = vst [vmem:[%s236 + $0x7c] sm:$0xf] %v922
        %s987 = sand.u32 %s121, 1
        %s988 = scalar_lea.sflag [#allocation4], %s987
        %s989 = sand.u32 %s121, 1
        %s990 = smul.addr %s989, 128
        %s991 = scalar_lea.vmem [#allocation7], %s990
        // Predicated region
        $region41: #{tpu_custom_call.1} parent=31 // pred_check
          %p992 = pneg %p131
        $region42: #{tpu_custom_call.1} parent=31 // pred_check_branch
          %994 = sbr.rel (%p992) target = $region44
        $region43: #{tpu_custom_call.1} parent=31 // pred_region
          %s995 = smul.u32 32, %s25
          %s997 = ssub.s32 2048, 2048
          %998 = vsyncadd %s988, %s997
          %s999 = sadd.s32 %s26, %s995
          %s1000 = smul.addr %s999, 64
          %s1001 = scalar_lea.hbm %s3, %s1000
          %s1002 = sshll.u32 %s991, 4
          %s1003 = int_to_ptr.vmem [resolvable:$true] %s1002
          %1008 = dma.vmem_to_hbm [thread:$0]  %s1003, 2048, %s1001, %s988, 64, 64, 4
        $region44: #{tpu_custom_call.1} parent=31 // pred_fallthru
          _
      $region32: #{tpu_custom_call.1} parent=5 // pred_fallthru
        _
      %p1009 = scmp.le.s32.totalorder 2, %s16
      // Predicated region
      $region45: #{tpu_custom_call.1} parent=5 // pred_check
        %p1010 = pneg %p1009
      $region46: #{tpu_custom_call.1} parent=5 // pred_check_branch
        %1012 = sbr.rel (%p1010) target = $region48
      $region47: #{tpu_custom_call.1} parent=5 // pred_region
        %s1013 = ssub.s32 %s16, 2
        // Predicated region
        $region49: #{tpu_custom_call.1} parent=47 // pred_check
          %p1014 = pneg %p137
        $region50: #{tpu_custom_call.1} parent=47 // pred_check_branch
          %1016 = sbr.rel (%p1014) target = $region52
        $region51: #{tpu_custom_call.1} parent=47 // pred_region
          %s1017 = sand.u32 %s122, 1
          %s1018 = scalar_lea.sflag [#allocation4], %s1017
          %s1019 = sand.u32 %s122, 1
          %s1020 = smul.addr %s1019, 128
          %s1021 = scalar_lea.vmem [#allocation7], %s1020
          %1022 = dma.done %s1018, 2048
        $region52: #{tpu_custom_call.1} parent=47 // pred_fallthru
          _
      $region48: #{tpu_custom_call.1} parent=5 // pred_fallthru
        _
    $region6: #{tpu_custom_call.1} parent=1 // loop_footer
      %s20 = sadd.s32 1, %s16
    $region7: #{tpu_custom_call.1} parent=1 // loop_footer_branch
      %15 = sbr.rel target = $region3
    $region8: #{tpu_custom_call.1} parent=1 // loop_exit
      _
    %1023 = vsyncpa [#allocation3], 1
    %s1024 = scalar_lea.sflag [#allocation3], 1
    %1025 = vsyncpa %s1024, 1
    %1026 = vsyncpa [#allocation6], 1
    %1027 = vsyncpa [#allocation4], 1
    %s1028 = scalar_lea.sflag [#allocation4], 1
    %1029 = vsyncpa %s1028, 1

</llo_original>
